<compile_context>
chip_gen: v5e
topology: v5e:2x2
jax: 0.10.0
libtpu: 0.0.40
codegen_flags: <defaults>
</compile_context>

<pallas_src>
import functools

import jax
import jax.numpy as jnp
import numpy as np
from jax.experimental import pallas as pl
from jax.experimental.pallas import tpu as pltpu

LANE = 128
SUBLANE = 8


def _round_up(v, m):
    return (v + m - 1) // m * m


def _pad_to(a, shape, value=0.0):
    return jnp.pad(a, [(0, s - d) for d, s in zip(a.shape, shape)],
                   constant_values=value)


# ---------------------------------------------------------------------------
# support1 = x @ W1   (row-tiled, computed exactly once)
# ---------------------------------------------------------------------------
def _support_kernel(x_ref, w_ref, o_ref):
    o_ref[...] = jnp.dot(
        x_ref[...], w_ref[...], preferred_element_type=jnp.float32
    ).astype(o_ref.dtype)


# ---------------------------------------------------------------------------
# Layer 1 aggregation (K-tiled):
#   acc += adj[i, k] @ support1[k]
#   on last k: h = dropout(relu(acc + b1)); out = h @ W2   (support2 rows)
# ---------------------------------------------------------------------------
def _gcn_layer1_kernel(*refs, has_mask):
    if has_mask:
        adj_ref, s1_ref, b1_ref, w2_ref, mask_ref, out_ref, acc_ref = refs
    else:
        adj_ref, s1_ref, b1_ref, w2_ref, out_ref, acc_ref = refs
        mask_ref = None

    k = pl.program_id(1)

    @pl.when(k == 0)
    def _():
        acc_ref[...] = jnp.zeros_like(acc_ref)

    acc_ref[...] += jnp.dot(adj_ref[...], s1_ref[...],
                            preferred_element_type=jnp.float32)

    @pl.when(k == pl.num_programs(1) - 1)
    def _():
        h = jnp.maximum(acc_ref[...] + b1_ref[...], 0.0)
        if mask_ref is not None:          # dropout keep-mask (already 1/(1-p))
            h = h * mask_ref[...]
        out_ref[...] = jnp.dot(
            h.astype(w2_ref.dtype), w2_ref[...],
            preferred_element_type=jnp.float32,
        ).astype(out_ref.dtype)


# ---------------------------------------------------------------------------
# Layer 2 aggregation (K-tiled):
#   acc += adj[i, k] @ support2[k]
#   on last k: z = acc + b2 (padded lanes are -inf), out = log_softmax(z)
# ---------------------------------------------------------------------------
def _gcn_layer2_kernel(adj_ref, s2_ref, b2_ref, out_ref, acc_ref):
    k = pl.program_id(1)

    @pl.when(k == 0)
    def _():
        acc_ref[...] = jnp.zeros_like(acc_ref)

    acc_ref[...] += jnp.dot(adj_ref[...], s2_ref[...],
                            preferred_element_type=jnp.float32)

    @pl.when(k == pl.num_programs(1) - 1)
    def _():
        z = acc_ref[...] + b2_ref[...]        # padded class lanes: 0 + (-inf)
        m = jnp.max(z, axis=-1, keepdims=True)
        s = z - m
        lse = jnp.log(jnp.sum(jnp.exp(s), axis=-1, keepdims=True))
        out_ref[...] = (s - lse).astype(out_ref.dtype)


# ---------------------------------------------------------------------------
# Wrapper
# ---------------------------------------------------------------------------
def gcn_forward(x, adj, w1, b1, w2, b2, *, p_drop=0.5, training=False, seed=0,
                compute_dtype=jnp.bfloat16, tm=256, tk=512,
                vmem_limit_bytes=48 * 1024 * 1024):
    N, F = x.shape
    H = w1.shape[1]
    C = w2.shape[1]

    Hp = _round_up(H, LANE)                  # hidden dim -> lane-dense
    Cp = _round_up(C, LANE)                  # class dim  -> lane-dense

    # ---- tile sizes -------------------------------------------------------
    # K tile: multiple of 128 lanes, no bigger than the padded graph.
    tk = max(LANE, min(_round_up(tk, LANE), _round_up(N, LANE)))
    Np = _round_up(N, tk)
    # Row tile: at least two row blocks so the "parallel" axis can split
    # across TensorCores (v7x megacore); must be a multiple of 8 dividing Np.
    tm = min(tm, max(SUBLANE, _round_up(pl.cdiv(N, 2), SUBLANE)))
    tm = _round_up(tm, SUBLANE)
    while Np % tm:
        tm -= SUBLANE
    steps_m = Np // tm
    steps_k = Np // tk

    cdt = compute_dtype
    isz = jnp.dtype(cdt).itemsize

    # ---- padded / cast operands ------------------------------------------
    adj_p = _pad_to(adj, (Np, Np)).astype(cdt)
    x_p = _pad_to(x, (Np, F)).astype(cdt)
    w1_p = _pad_to(w1, (F, Hp)).astype(cdt)
    w2_p = _pad_to(w2, (Hp, Cp)).astype(cdt)
    b1_p = _pad_to(b1.reshape(1, -1).astype(jnp.float32), (1, Hp))
    # padded class lanes get -inf straight from the bias -> no in-kernel mask
    b2_p = _pad_to(b2.reshape(1, -1).astype(jnp.float32), (1, Cp),
                   value=-jnp.inf)

    cp_row = pltpu.CompilerParams(
        dimension_semantics=("parallel",),
        vmem_limit_bytes=vmem_limit_bytes)
    cp_agg = pltpu.CompilerParams(
        dimension_semantics=("parallel", "arbitrary"),
        vmem_limit_bytes=vmem_limit_bytes)

    # ---- support1 = x @ W1 (computed once) --------------------------------
    s1 = pl.pallas_call(
        _support_kernel,
        grid=(steps_m,),
        in_specs=[pl.BlockSpec((tm, F), lambda i: (i, 0)),
                  pl.BlockSpec((F, Hp), lambda i: (0, 0))],
        out_specs=pl.BlockSpec((tm, Hp), lambda i: (i, 0)),
        out_shape=jax.ShapeDtypeStruct((Np, Hp), cdt),
        compiler_params=cp_row,
        cost_estimate=pl.CostEstimate(
            flops=2 * Np * F * Hp, transcendentals=0,
            bytes_accessed=(Np * F + F * Hp + Np * Hp) * isz),
    )(x_p, w1_p)

    # ---- dropout keep-mask (host PRNG; works compiled and interpreted) ----
    use_mask = bool(training) and p_drop > 0.0
    if use_mask:
        if p_drop >= 1.0:
            mask = jnp.zeros((Np, Hp), jnp.float32)
        else:
            keep = jax.random.bernoulli(jax.random.PRNGKey(seed),
                                        1.0 - p_drop, (Np, Hp))
            mask = keep.astype(jnp.float32) * (1.0 / (1.0 - p_drop))

    # ---- layer 1: s2 = dropout(relu(adj @ s1 + b1)) @ W2 ------------------
    in_specs1 = [
        pl.BlockSpec((tm, tk), lambda i, k: (i, k)),     # adj row/K block
        pl.BlockSpec((tk, Hp), lambda i, k: (k, 0)),     # support1 K block
        pl.BlockSpec((1, Hp), lambda i, k: (0, 0)),      # b1
        pl.BlockSpec((Hp, Cp), lambda i, k: (0, 0)),     # W2 (tiny, resident)
    ]
    args1 = [adj_p, s1, b1_p, w2_p]
    if use_mask:
        in_specs1.append(pl.BlockSpec((tm, Hp), lambda i, k: (i, 0)))
        args1.append(mask)

    cost1 = pl.CostEstimate(
        flops=2 * (Np * Np * Hp + Np * Hp * Cp),
        transcendentals=0,
        bytes_accessed=(Np * Np * isz + steps_m * Np * Hp * isz
                        + Hp * 4 + Hp * Cp * isz + Np * Cp * isz
                        + (steps_k * Np * Hp * 4 if use_mask else 0)))

    s2 = pl.pallas_call(
        functools.partial(_gcn_layer1_kernel, has_mask=use_mask),
        grid=(steps_m, steps_k),
        in_specs=in_specs1,
        out_specs=pl.BlockSpec((tm, Cp), lambda i, k: (i, 0)),
        out_shape=jax.ShapeDtypeStruct((Np, Cp), cdt),
        scratch_shapes=[pltpu.VMEM((tm, Hp), jnp.float32)],
        compiler_params=cp_agg,
        cost_estimate=cost1,
    )(*args1)

    # ---- layer 2: out = log_softmax(adj @ s2 + b2) -------------------------
    cost2 = pl.CostEstimate(
        flops=2 * Np * Np * Cp,
        transcendentals=Np * (Cp + 1),
        bytes_accessed=(Np * Np * isz + steps_m * Np * Cp * isz
                        + Cp * 4 + Np * Cp * 4))

    out = pl.pallas_call(
        _gcn_layer2_kernel,
        grid=(steps_m, steps_k),
        in_specs=[
            pl.BlockSpec((tm, tk), lambda i, k: (i, k)),   # adj row/K block
            pl.BlockSpec((tk, Cp), lambda i, k: (k, 0)),   # support2 K block
            pl.BlockSpec((1, Cp), lambda i, k: (0, 0)),    # b2 (-inf padded)
        ],
        out_specs=pl.BlockSpec((tm, Cp), lambda i, k: (i, 0)),
        out_shape=jax.ShapeDtypeStruct((Np, Cp), jnp.float32),
        scratch_shapes=[pltpu.VMEM((tm, Cp), jnp.float32)],
        compiler_params=cp_agg,
        cost_estimate=cost2,
    )(adj_p, s2, b2_p)

    return out[:N, :C]


# ---------------------------------------------------------------------------
# Pure-JAX reference (eval mode) + init matching GraphConvolution.reset_parameters
# ---------------------------------------------------------------------------
def gcn_reference(x, adj, w1, b1, w2, b2):
    h = jnp.maximum(adj @ (x @ w1) + b1, 0.0)
    z = adj @ (h @ w2) + b2
    return jax.nn.log_softmax(z, axis=1)


def init_params(key, nfeat, nhid, nclass):
    # uniform(-stdv, stdv), stdv = 1/sqrt(out_features)
    k1, k2, k3, k4 = jax.random.split(key, 4)
    s1 = 1.0 / np.sqrt(nhid)
    s2 = 1.0 / np.sqrt(nclass)
    w1 = jax.random.uniform(k1, (nfeat, nhid), jnp.float32, -s1, s1)
    b1 = jax.random.uniform(k2, (nhid,), jnp.float32, -s1, s1)
    w2 = jax.random.uniform(k3, (nhid, nclass), jnp.float32, -s2, s2)
    b2 = jax.random.uniform(k4, (nclass,), jnp.float32, -s2, s2)
    return w1, b1, w2, b2


if __name__ == "__main__":
    N, NFEAT, NHID, NCLASS = 128, 32, 20, 7

    key = jax.random.PRNGKey(0)
    k_x, k_adj, k_par = jax.random.split(key, 3)

    # Node features
    x = jax.random.normal(k_x, (N, NFEAT), jnp.float32)

    # Symmetric, row-normalized dense adjacency with self-loops
    a = (jax.random.uniform(k_adj, (N, N)) < 0.05).astype(jnp.float32)
    a = jnp.maximum(a, a.T) + jnp.eye(N, dtype=jnp.float32)
    adj = a / jnp.sum(a, axis=1, keepdims=True)

    w1, b1, w2, b2 = init_params(k_par, NFEAT, NHID, NCLASS)

    ref = gcn_reference(x, adj, w1, b1, w2, b2)

    # 1) f32 path, eval mode (dropout = identity): tight check vs reference.
    out_f32 = jax.block_until_ready(
        gcn_forward(x, adj, w1, b1, w2, b2, compute_dtype=jnp.float32))
    np.testing.assert_allclose(np.asarray(out_f32), np.asarray(ref),
                               rtol=1e-5, atol=1e-5)

    # 2) default bf16 adj/support path (f32 accumulation): loose check.
    out_bf16 = jax.block_until_ready(gcn_forward(x, adj, w1, b1, w2, b2))
    np.testing.assert_allclose(np.asarray(out_bf16), np.asarray(ref),
                               rtol=5e-2, atol=5e-2)

    # 3) training mode (module default training=True): dropout smoke test —
    #    output must be finite and a valid per-row log-distribution.
    out_tr = jax.block_until_ready(
        gcn_forward(x, adj, w1, b1, w2, b2, training=True, seed=1234,
                    compute_dtype=jnp.float32))
    out_tr_np = np.asarray(out_tr)
    assert np.all(np.isfinite(out_tr_np))
    np.testing.assert_allclose(np.exp(out_tr_np).sum(axis=1), np.ones(N),
                               rtol=1e-4, atol=1e-4)

    print("KERNEL_OK")
</pallas_src>

<mosaic_0001>
module attributes {stable_mosaic.version = 11 : i64} {
  func.func @_support_kernel(%arg0: i32, %arg1: memref<64x32xf32, #tpu.memory_space<vmem>>, %arg2: memref<32x128xf32, #tpu.memory_space<vmem>>, %arg3: memref<64x128xf32, #tpu.memory_space<vmem>>) attributes {dimension_semantics = [#tpu.dimension_semantics<parallel>], iteration_bounds = array<i64: 2>, scalar_prefetch = 0 : i64, scratch_operands = 0 : i64, tpu.core_type = #tpu.core_type<tc>, window_params = [{transform_indices = @transform_0, window_bounds = array<i64: 64, 32>}, {pipeline_mode = #tpu.pipeline_mode<synchronous>, transform_indices = @transform_1, window_bounds = array<i64: 32, 128>}, {transform_indices = @transform_2, window_bounds = array<i64: 64, 128>}]} {
    %c0 = arith.constant 0 : index
    %c0_0 = arith.constant 0 : index
    %0 = vector.load %arg1[%c0, %c0_0] : memref<64x32xf32, #tpu.memory_space<vmem>>, vector<64x32xf32>
    %c0_1 = arith.constant 0 : index
    %c0_2 = arith.constant 0 : index
    %1 = vector.load %arg2[%c0_1, %c0_2] : memref<32x128xf32, #tpu.memory_space<vmem>>, vector<32x128xf32>
    %cst = arith.constant dense<0.000000e+00> : vector<64x128xf32>
    %2 = tpu.matmul %0, %1, %cst {dimension_numbers = #tpu.dot_dimension_numbers<[1], [0], [0], [1], [0, 0, 1, 1], [], []>} : vector<64x32xf32>, vector<32x128xf32>, vector<64x128xf32> -> vector<64x128xf32>
    %c0_3 = arith.constant 0 : index
    %c0_4 = arith.constant 0 : index
    %3 = vector.load %arg3[%c0_3, %c0_4] : memref<64x128xf32, #tpu.memory_space<vmem>>, vector<64x128xf32>
    tpu.vector_store %arg3[%c0_3, %c0_4], %2 {strides = array<i32>} : memref<64x128xf32, #tpu.memory_space<vmem>>, vector<64x128xf32>,
    return
  }
  func.func @transform_0(%arg0: i32) -> (i32, i32) {
    %c0_i32 = arith.constant 0 : i32
    %c0_i32_0 = arith.constant 0 : i32
    return %arg0, %c0_i32 : i32, i32
  }
  func.func @transform_1(%arg0: i32) -> (i32, i32) {
    %c0_i32 = arith.constant 0 : i32
    %c0_i32_0 = arith.constant 0 : i32
    %c0_i32_1 = arith.constant 0 : i32
    return %c0_i32, %c0_i32_0 : i32, i32
  }
  func.func @transform_2(%arg0: i32) -> (i32, i32) {
    %c0_i32 = arith.constant 0 : i32
    %c0_i32_0 = arith.constant 0 : i32
    return %arg0, %c0_i32 : i32, i32
  }
}

</mosaic_0001>

<llo_original>
// kernel: tpu_custom_call.1
$region0: #{tpu_custom_call.1}
  #allocation0 [shape = 'u32[]', space=smem, size = 0x4, offset = 0x4, fixed_abs, tag = 'smem constant byte address 0x4 - core index']
  #allocation1 [shape = 'u32[72,128]{1,0:T(1,128)}', space=vmem, size = 0x9000, scoped, tag = 'internal scratch']
  %s0 = inlined_call_operand.vmem [shape: f32[128,32], index: 0, kind: input, shape index: {}]
  %s1 = inlined_call_operand.vmem [shape: f32[32,128], index: 1, kind: input, shape index: {}]
  %s2 = inlined_call_operand.hbm [shape: f32[128,128], index: 2, kind: output, shape index: {}]
  %s3 = sld [smem:[#allocation0]]
  $region41: #{tpu_custom_call.1} parent=0
    _
  %s5 = ssub.s32 1, %s3
  %s6 = scalar_select 0, %s5, %s3
  $region1: #{tpu_custom_call.1} parent=0
    #allocation2 [shape = 'u8[65536]{0}', space=vmem, size = 0x10000, scoped, tag = 'output window, operand 0']
    #allocation3 [shape = 's32[2]{0}', space=sflag, size = 0x8, scoped, tag = 'scoped memory for tpu_custom_call.1']
    %7 = vsyncpa [#allocation3], 0
    %s8 = scalar_lea.sflag [#allocation3], 1
    %9 = vsyncpa %s8, 0
    loop: start=0, step=1, limit=4
    $region2: #{tpu_custom_call.1} parent=1 // loop_pre_header
      _
    $region3: #{tpu_custom_call.1} parent=1 // loop_header
      %s11 = sphi 0, %s15
      %p12 = scmp.ge.s32.totalorder %s11, 4
      %s21 = sphi 0, %s23
      %s24 = sphi 0, %s21
      %s25 = sphi 0, %s24
      %s41 = sphi 0, %s25
      %s45 = sphi 0, %s45
      %s47 = sphi 0, %s45
      %s48 = sphi 0, %s47
      %s62 = sphi 0, %s48
      %s68 = sphi 0, %s70
      %s71 = sphi 0, %s68
      %s72 = sphi 0, %s71
      %s88 = sphi 0, %s72
    $region4: #{tpu_custom_call.1} parent=1 // loop_header_branch
      %14 = sbr.rel (%p12) target = $region8
    $region5: #{tpu_custom_call.1} parent=1 // loop_body
      %s16 = ssub.s32 %s11, 1
      %s17 = ssub.s32 %s11, 2
      %s18 = sadd.s32 %s11, 1
      %s19 = ssub.s32 %s11, %s18
      %p20 = scmp.eq.s32.totalorder %s19, 0
      %s22 = sadd.s32 %s21, 1
      %s23 = scalar_select %p20, %s21, %s22
      %p26 = pneg %p20
      %p27 = scmp.eq.s32.totalorder %s11, 1
      %p28 = por %p26, %p27
      %p29 = scmp.ne.s32.totalorder %s21, %s24
      %p30 = scmp.eq.s32.totalorder %s11, 0
      %p31 = por %p29, %p30
      %p32 = scmp.ne.s32.totalorder %s21, %s24
      %p33 = scmp.eq.s32.totalorder %s16, 1
      %p34 = por %p32, %p33
      %p35 = scmp.ne.s32.totalorder %s24, %s25
      %p36 = scmp.eq.s32.totalorder %s16, 0
      %p37 = por %p35, %p36
      %p38 = scmp.ne.s32.totalorder %s24, %s25
      %p39 = scmp.eq.s32.totalorder %s17, 1
      %p40 = por %p38, %p39
      %p42 = scmp.ne.s32.totalorder %s25, %s41
      %p43 = scmp.eq.s32.totalorder %s17, 0
      %p44 = por %p42, %p43
      %s46 = sadd.s32 %s45, 1
      %p49 = scmp.eq.s32.totalorder %s11, 1
      %p50 = scmp.ne.s32.totalorder %s45, %s47
      %p51 = scmp.eq.s32.totalorder %s11, 0
      %p52 = por %p50, %p51
      %p53 = scmp.ne.s32.totalorder %s45, %s47
      %p54 = scmp.eq.s32.totalorder %s16, 1
      %p55 = por %p53, %p54
      %p56 = scmp.ne.s32.totalorder %s47, %s48
      %p57 = scmp.eq.s32.totalorder %s16, 0
      %p58 = por %p56, %p57
      %p59 = scmp.ne.s32.totalorder %s47, %s48
      %p60 = scmp.eq.s32.totalorder %s17, 1
      %p61 = por %p59, %p60
      %p63 = scmp.ne.s32.totalorder %s48, %s62
      %p64 = scmp.eq.s32.totalorder %s17, 0
      %p65 = por %p63, %p64
      %s66 = ssub.s32 %s11, %s18
      %p67 = scmp.eq.s32.totalorder %s66, 0
      %s69 = sadd.s32 %s68, 1
      %s70 = scalar_select %p67, %s68, %s69
      %p73 = pneg %p67
      %p74 = scmp.eq.s32.totalorder %s11, 1
      %p75 = por %p73, %p74
      %p76 = scmp.ne.s32.totalorder %s68, %s71
      %p77 = scmp.eq.s32.totalorder %s11, 0
      %p78 = por %p76, %p77
      %p79 = scmp.ne.s32.totalorder %s68, %s71
      %p80 = scmp.eq.s32.totalorder %s16, 1
      %p81 = por %p79, %p80
      %p82 = scmp.ne.s32.totalorder %s71, %s72
      %p83 = scmp.eq.s32.totalorder %s16, 0
      %p84 = por %p82, %p83
      %p85 = scmp.ne.s32.totalorder %s71, %s72
      %p86 = scmp.eq.s32.totalorder %s17, 1
      %p87 = por %p85, %p86
      %p89 = scmp.ne.s32.totalorder %s72, %s88
      %p90 = scmp.eq.s32.totalorder %s17, 0
      %p91 = por %p89, %p90
      %p92 = scmp.le.s32.totalorder 1, %s11
      %p93 = scmp.lt.s32.totalorder %s11, 3
      %p94 = pnand %p92, %p93
      %p95 = pneg %p94
      // Predicated region
      $region9: #{tpu_custom_call.1} parent=5 // pred_check
        _
      $region10: #{tpu_custom_call.1} parent=5 // pred_check_branch
        %97 = sbr.rel (%p94) target = $region12
      $region11: #{tpu_custom_call.1} parent=5 // pred_region
        %s98 = ssub.s32 %s11, 1
        // Predicated region
        $region13: #{tpu_custom_call.1} parent=11 // pred_check
          %p99 = pneg %p58
        $region14: #{tpu_custom_call.1} parent=11 // pred_check_branch
          %101 = sbr.rel (%p99) target = $region16
        $region15: #{tpu_custom_call.1} parent=11 // pred_region
          _
        $region16: #{tpu_custom_call.1} parent=11 // pred_fallthru
          _
      $region12: #{tpu_custom_call.1} parent=5 // pred_fallthru
        _
      %p102 = scmp.lt.s32.totalorder %s11, 2
      // Predicated region
      $region17: #{tpu_custom_call.1} parent=5 // pred_check
        %p103 = pneg %p102
      $region18: #{tpu_custom_call.1} parent=5 // pred_check_branch
        %105 = sbr.rel (%p103) target = $region20
      $region19: #{tpu_custom_call.1} parent=5 // pred_region
        // Predicated region
        $region21: #{tpu_custom_call.1} parent=19 // pred_check
          %p106 = pneg %p31
        $region22: #{tpu_custom_call.1} parent=19 // pred_check_branch
          %108 = sbr.rel (%p106) target = $region24
        $region23: #{tpu_custom_call.1} parent=19 // pred_region
          %s109 = smul.u32 8, %s11
          %p110 = scmp.lt.s32.totalorder %s109, 15
          %s111 = scalar_select %p110, %s109, 15
          %s112 = smul.addr %s111, 8
          %s113 = scalar_lea.vmem %s0, %s112
          %s114 = smul.u32 8, %s11
        $region24: #{tpu_custom_call.1} parent=19 // pred_fallthru
          _
      $region20: #{tpu_custom_call.1} parent=5 // pred_fallthru
        _
      %p115 = scmp.le.s32.totalorder 1, %s11
      %p116 = scmp.lt.s32.totalorder %s11, 3
      %p117 = pnand %p115, %p116
      %p118 = pneg %p117
      // Predicated region
      $region25: #{tpu_custom_call.1} parent=5 // pred_check
        _
      $region26: #{tpu_custom_call.1} parent=5 // pred_check_branch
        %120 = sbr.rel (%p117) target = $region28
      $region27: #{tpu_custom_call.1} parent=5 // pred_region
        %s121 = ssub.s32 %s11, 1
        %s122 = smul.u32 8, %s16
        %p123 = scmp.lt.s32.totalorder %s122, 15
        %s124 = scalar_select %p123, %s122, 15
        %s125 = smul.addr %s124, 8
        %s126 = scalar_lea.vmem %s0, %s125
        %p127 = pneg %p37
        %p128 = pneg %p34
        %p129 = pneg %p58
        %p130 = pneg %p55
        %p131 = pneg %p84
        %p132 = pneg %p81
        %s133 = sand.u32 %s71, 1
        %s134 = scalar_lea.sflag [#allocation3], %s133
        %s135 = sand.u32 %s71, 1
        %s136 = smul.addr %s135, 64
        %s137 = scalar_lea.vmem [#allocation2], %s136
        %s138 = smul.u32 8, %s16
        %p139 = scmp.lt.s32.totalorder %s138, 15
        %s140 = scalar_select %p139, %s138, 15
        %s141 = smul.addr %s140, 8
        %s142 = scalar_lea.vmem %s0, %s141
        %s143 = smul.u32 8, %s16
        %s144 = smul.u32 8, %s16
        %v145 = vld [vmem:[%s142] sm:$0xff]
        %v146 = vld [vmem:[%s142 + $0x8] sm:$0xff]
        %v147 = vld [vmem:[%s142 + $0x10] sm:$0xff]
        %v148 = vld [vmem:[%s142 + $0x18] sm:$0xff]
        %v149 = vld [vmem:[%s142 + $0x20] sm:$0xff]
        %v150 = vld [vmem:[%s142 + $0x28] sm:$0xff]
        %v151 = vld [vmem:[%s142 + $0x30] sm:$0xff]
        %v152 = vld [vmem:[%s142 + $0x38] sm:$0xff]
        %v153 = vld [vmem:[%s1] sm:$0xff]
        %v154 = vld [vmem:[%s1 + $0x8] sm:$0xff]
        %v155 = vld [vmem:[%s1 + $0x10] sm:$0xff]
        %v156 = vld [vmem:[%s1 + $0x18] sm:$0xff]
        %vm157 = vcmask 261120
        %v159 = vsel %vm157, %v145, 0
        %v162 = vsel %vm157, %v146, 0
        %v165 = vsel %vm157, %v147, 0
        %v168 = vsel %vm157, %v148, 0
        %v171 = vsel %vm157, %v149, 0
        %v174 = vsel %vm157, %v150, 0
        %v177 = vsel %vm157, %v151, 0
        %v180 = vsel %vm157, %v152, 0
        %182 = vmatpush.msra.mxu0 0.0
        %183 = vmatpush.msra.mxu0 0.0
        %184 = vmatpush.msra.mxu0 0.0
        %185 = vmatpush.msra.mxu0 0.0
        %186 = vmatpush.msra.mxu0 0.0
        %187 = vmatpush.msra.mxu0 0.0
        %188 = vmatpush.msra.mxu0 0.0
        %189 = vmatpush.msra.mxu0 0.0
        %190 = vmatpush.msra.mxu0 0.0
        %191 = vmatpush.msra.mxu0 0.0
        %192 = vmatpush.msra.mxu0 0.0
        %193 = vmatpush.msra.mxu0 0.0
        %194 = vmatpush.msra.mxu0 %v156
        %195 = vmatpush.msra.mxu0 %v155
        %196 = vmatpush.msra.mxu0 %v154
        %197 = vmatpush.msra.mxu0 %v153
        %198 = vmatmul.f32.gmra.mxu0 %v159
        %v199 = vpop.f32.mrf.mxu0
        %v200 = vadd.f32 0.0, %v199
        %201 = vmatmul.f32.gmra.mxu0 %v162
        %v202 = vpop.f32.mrf.mxu0
        %v203 = vadd.f32 0.0, %v202
        %204 = vmatmul.f32.gmra.mxu0 %v165
        %v205 = vpop.f32.mrf.mxu0
        %v206 = vadd.f32 0.0, %v205
        %207 = vmatmul.f32.gmra.mxu0 %v168
        %v208 = vpop.f32.mrf.mxu0
        %v209 = vadd.f32 0.0, %v208
        %210 = vmatmul.f32.gmra.mxu0 %v171
        %v211 = vpop.f32.mrf.mxu0
        %v212 = vadd.f32 0.0, %v211
        %213 = vmatmul.f32.gmra.mxu0 %v174
        %v214 = vpop.f32.mrf.mxu0
        %v215 = vadd.f32 0.0, %v214
        %216 = vmatmul.f32.gmra.mxu0 %v177
        %v217 = vpop.f32.mrf.mxu0
        %v218 = vadd.f32 0.0, %v217
        %219 = vmatmul.f32.gmra.mxu0 %v180
        %v220 = vpop.f32.mrf.mxu0
        %v221 = vadd.f32 0.0, %v220
        %222 = vdwg.mxu0
        %223 = vst [vmem:[%s137] sm:$0xff] %v200
        %224 = vst [vmem:[%s137 + $0x8] sm:$0xff] %v203
        %225 = vst [vmem:[%s137 + $0x10] sm:$0xff] %v206
        %226 = vst [vmem:[%s137 + $0x18] sm:$0xff] %v209
        %227 = vst [vmem:[%s137 + $0x20] sm:$0xff] %v212
        %228 = vst [vmem:[%s137 + $0x28] sm:$0xff] %v215
        %229 = vst [vmem:[%s137 + $0x30] sm:$0xff] %v218
        %230 = vst [vmem:[%s137 + $0x38] sm:$0xff] %v221
        %s231 = sand.u32 %s71, 1
        %s232 = scalar_lea.sflag [#allocation3], %s231
        %s233 = sand.u32 %s71, 1
        %s234 = smul.addr %s233, 64
        %s235 = scalar_lea.vmem [#allocation2], %s234
        // Predicated region
        $region29: #{tpu_custom_call.1} parent=27 // pred_check
          %p236 = pneg %p81
        $region30: #{tpu_custom_call.1} parent=27 // pred_check_branch
          %238 = sbr.rel (%p236) target = $region32
        $region31: #{tpu_custom_call.1} parent=27 // pred_region
          %s239 = smul.u32 8, %s16
          %241 = vsyncadd %s232, 0
          %s242 = smul.addr %s239, 8
          %s243 = scalar_lea.hbm %s2, %s242
          %s244 = sshll.u32 %s235, 4
          %s245 = int_to_ptr.vmem [resolvable:$true] %s244
          %s246 = sshll.u32 %s243, 4
          %s247 = int_to_ptr.hbm [resolvable:$true] %s246
          %252 = dma.vmem_to_hbm [thread:$0]  %s245, 1024, %s247, %s232, 128, 128, 8
        $region32: #{tpu_custom_call.1} parent=27 // pred_fallthru
          _
      $region28: #{tpu_custom_call.1} parent=5 // pred_fallthru
        _
      %p253 = scmp.le.s32.totalorder 2, %s11
      // Predicated region
      $region33: #{tpu_custom_call.1} parent=5 // pred_check
        %p254 = pneg %p253
      $region34: #{tpu_custom_call.1} parent=5 // pred_check_branch
        %256 = sbr.rel (%p254) target = $region36
      $region35: #{tpu_custom_call.1} parent=5 // pred_region
        %s257 = ssub.s32 %s11, 2
        // Predicated region
        $region37: #{tpu_custom_call.1} parent=35 // pred_check
          %p258 = pneg %p87
        $region38: #{tpu_custom_call.1} parent=35 // pred_check_branch
          %260 = sbr.rel (%p258) target = $region40
        $region39: #{tpu_custom_call.1} parent=35 // pred_region
          %s261 = sand.u32 %s72, 1
          %s262 = scalar_lea.sflag [#allocation3], %s261
          %s263 = sand.u32 %s72, 1
          %s264 = smul.addr %s263, 64
          %s265 = scalar_lea.vmem [#allocation2], %s264
          %267 = dma.done %s262, 1024
        $region40: #{tpu_custom_call.1} parent=35 // pred_fallthru
          _
      $region36: #{tpu_custom_call.1} parent=5 // pred_fallthru
        _
    $region6: #{tpu_custom_call.1} parent=1 // loop_footer
      %s15 = sadd.s32 1, %s11
    $region7: #{tpu_custom_call.1} parent=1 // loop_footer_branch
      %10 = sbr.rel target = $region3
    $region8: #{tpu_custom_call.1} parent=1 // loop_exit
      _
    %268 = vsyncpa [#allocation3], 1
    %s269 = scalar_lea.sflag [#allocation3], 1
    %270 = vsyncpa %s269, 1

</llo_original>
